<compile_context>
chip_gen: v5e
topology: v5e:2x2
jax: 0.10.0
libtpu: 0.0.40
codegen_flags: <defaults>
</compile_context>

<pallas_src>
import functools
import math

import jax
import jax.numpy as jnp
from jax import lax
from jax.experimental import pallas as pl
from jax.experimental.pallas import tpu as pltpu


def _round_up(x, m):
    return (x + m - 1) // m * m


def _head_matmul_kernel(p_ref, w_ref, b_ref, o_ref):
    """One M-tile of the fused (reg | cls) head GEMM.

    p_ref: (tile_m, 9*Cin)    im2col patches, bf16 (VMEM)
    w_ref: (9*Cin, Cout_pad)  fused reg+cls weights, zero-padded to a lane multiple, bf16
    b_ref: (1, Cout_pad)      fused bias, f32
    o_ref: (tile_m, Cout_pad) output tile, f32 (lane-dense, unmasked stores)
    """
    acc = jnp.dot(p_ref[...], w_ref[...], preferred_element_type=jnp.float32)
    o_ref[...] = (acc + b_ref[...]).astype(o_ref.dtype)


def _pick_tile_m(M, max_tile=1024):
    """Largest multiple-of-8 divisor of M up to max_tile, else the full M."""
    best = None
    for t in range(8, min(M, max_tile) + 1, 8):
        if M % t == 0:
            best = t
    return best if best is not None else M


def gfocal_heads_forward(x_nchw, w_reg_oihw, b_reg, w_cls_oihw, b_cls, *,
                         num_anchors, num_reg_out, num_cls,
                         reg_scale=1.0, tile_m=None,
                         operand_dtype=jnp.bfloat16):
    """Fused forward of GFocalRegHead + GFocalClsHead (+ Scale on the reg branch).

    x_nchw      : (B, Cin, H, W) f32            (PyTorch NCHW layout)
    w_reg_oihw  : (A*num_reg_out, Cin, 3, 3) f32 (PyTorch OIHW layout)
    b_reg       : (A*num_reg_out,) f32
    w_cls_oihw  : (A*num_cls, Cin, 3, 3) f32
    b_cls       : (A*num_cls,) f32
    returns     : (reg (B, H*W*A, num_reg_out), cls (B, H*W*A, num_cls))
    """
    B, Cin, H, W = x_nchw.shape
    Cout_reg = num_anchors * num_reg_out
    Cout_cls = num_anchors * num_cls
    assert w_reg_oihw.shape == (Cout_reg, Cin, 3, 3), w_reg_oihw.shape
    assert w_cls_oihw.shape == (Cout_cls, Cin, 3, 3), w_cls_oihw.shape
    assert b_reg.shape == (Cout_reg,) and b_cls.shape == (Cout_cls,)

    K9 = 9 * Cin
    Cout = Cout_reg + Cout_cls
    Cout_pad = _round_up(Cout, 128)   # lane-dense output regardless of W / Cout

    # Fuse both head convolutions (and the reg-branch Scale) into one GEMM:
    # OIHW -> HWIO -> (9*Cin, Cout), row order (ky, kx, cin); columns are (reg | cls | pad).
    def to_mat(w_oihw):
        return jnp.transpose(w_oihw, (2, 3, 1, 0)).reshape(K9, w_oihw.shape[0])

    w_all = jnp.concatenate([to_mat(w_reg_oihw) * reg_scale, to_mat(w_cls_oihw)], axis=1)
    b_all = jnp.concatenate([b_reg * reg_scale, b_cls], axis=0)
    w_all = jnp.pad(w_all, ((0, 0), (0, Cout_pad - Cout))).astype(operand_dtype)
    b_all = jnp.pad(b_all, (0, Cout_pad - Cout)).reshape(1, Cout_pad).astype(jnp.float32)

    # Hoisted im2col (small feature maps): (B*H*W, 9*Cin) in column-block order (ky, kx, cin),
    # matching the weight reshape above. The kernel then does a single dense MXU dot per tile.
    # TODO(synk): for production FPN levels (Cin=256, 100+^2 maps) fold the halo pad and
    #             im2col into the kernel (halo-tiled input + 9 accumulated taps) to avoid the
    #             9x HBM blow-up of the hoisted patches and fit v7x's 64 MiB VMEM.
    x_pad = jnp.pad(jnp.transpose(x_nchw, (0, 2, 3, 1)).astype(operand_dtype),
                    ((0, 0), (1, 1), (1, 1), (0, 0)))
    taps = [x_pad[:, ky:ky + H, kx:kx + W, :] for ky in range(3) for kx in range(3)]
    patches = jnp.concatenate(taps, axis=-1).reshape(B * H * W, K9)

    M = B * H * W
    if tile_m is None:
        tile_m = _pick_tile_m(M)
    assert M % tile_m == 0 and (tile_m % 8 == 0 or tile_m == M), (M, tile_m)

    flops = 2 * M * K9 * Cout_pad
    bytes_accessed = (M * K9 * 2            # patches (bf16)
                      + K9 * Cout_pad * 2   # weights (bf16)
                      + Cout_pad * 4        # bias
                      + M * Cout_pad * 4)   # output (f32)

    out = pl.pallas_call(
        _head_matmul_kernel,
        out_shape=jax.ShapeDtypeStruct((M, Cout_pad), jnp.float32),
        grid_spec=pltpu.PrefetchScalarGridSpec(
            num_scalar_prefetch=0,
            grid=(M // tile_m,),
            in_specs=[
                pl.BlockSpec((tile_m, K9), lambda m: (m, 0)),
                pl.BlockSpec((K9, Cout_pad), lambda m: (0, 0)),   # weights resident
                pl.BlockSpec((1, Cout_pad), lambda m: (0, 0)),    # bias resident
            ],
            out_specs=pl.BlockSpec((tile_m, Cout_pad), lambda m: (m, 0)),
        ),
        compiler_params=pltpu.CompilerParams(
            dimension_semantics=("parallel",)),
        cost_estimate=pl.CostEstimate(flops=flops, transcendentals=0,
                                      bytes_accessed=bytes_accessed),
    )(patches, w_all, b_all)

    # (M, Cout_pad) rows are (b, h, w) row-major; columns within each head chunk are
    # (anchor, per_anchor) — so the reshapes below are free row-major views.
    out = out.reshape(B, H * W, Cout_pad).astype(x_nchw.dtype)
    reg = out[..., :Cout_reg].reshape(B, H * W * num_anchors, num_reg_out)
    cls = out[..., Cout_reg:Cout_reg + Cout_cls].reshape(B, H * W * num_anchors, num_cls)
    return reg, cls


def _reference_head(x_nchw, w_oihw, bias, num_anchors, num_per_anchor, scale=1.0):
    """Pure-JAX f32 reference matching PyTorch Conv2d(3,1,1) + permute/view (+ Scale)."""
    out = lax.conv_general_dilated(
        x_nchw, w_oihw, window_strides=(1, 1), padding="SAME",
        dimension_numbers=("NCHW", "OIHW", "NCHW"))
    out = (out + bias.reshape(1, -1, 1, 1)) * scale
    B, _, H, W = out.shape
    out = jnp.transpose(out, (0, 2, 3, 1))
    return out.reshape(B, H * W * num_anchors, num_per_anchor)


if __name__ == "__main__":
    # Small shapes consistent with the module's forward.
    B, Cin, H, W = 2, 32, 16, 16
    num_anchors = 2
    reg_max = 3
    num_output = 4 * (reg_max + 1)   # 16 -> Cout_reg = 32
    num_cls = 20                     #    -> Cout_cls = 40

    key = jax.random.PRNGKey(0)
    kx_, kwr, kwc = jax.random.split(key, 3)
    x = jax.random.normal(kx_, (B, Cin, H, W), dtype=jnp.float32)

    # Reg head params: OIHW weights (std=0.01), zero bias.
    w_reg = 0.01 * jax.random.normal(kwr, (num_anchors * num_output, Cin, 3, 3), jnp.float32)
    b_reg = jnp.zeros((num_anchors * num_output,), jnp.float32)

    # Cls head params: OIHW weights (std=0.01), bias = -log((1-0.01)/0.01).
    w_cls = 0.01 * jax.random.normal(kwc, (num_anchors * num_cls, Cin, 3, 3), jnp.float32)
    b_cls = jnp.full((num_anchors * num_cls,), -math.log((1 - 0.01) / 0.01), jnp.float32)

    fwd = jax.jit(functools.partial(
        gfocal_heads_forward,
        num_anchors=num_anchors, num_reg_out=num_output, num_cls=num_cls,
        reg_scale=1.0))

    out_reg, out_cls = jax.block_until_ready(fwd(x, w_reg, b_reg, w_cls, b_cls))

    ref_reg = _reference_head(x, w_reg, b_reg, num_anchors, num_output)
    ref_cls = _reference_head(x, w_cls, b_cls, num_anchors, num_cls)

    assert out_reg.shape == (B, H * W * num_anchors, num_output), out_reg.shape
    assert out_cls.shape == (B, H * W * num_anchors, num_cls), out_cls.shape
    # bf16 operands / f32 accumulation -> looser tolerance than pure f32.
    assert jnp.allclose(out_reg, ref_reg, atol=2e-2, rtol=2e-2), "reg head mismatch vs reference"
    assert jnp.allclose(out_cls, ref_cls, atol=2e-2, rtol=2e-2), "cls head mismatch vs reference"

    print("KERNEL_OK")
</pallas_src>

<mosaic_0001>
module attributes {stable_mosaic.version = 11 : i64} {
  func.func @_head_matmul_kernel(%arg0: i32, %arg1: memref<512x288xbf16, #tpu.memory_space<vmem>>, %arg2: memref<288x128xbf16, #tpu.memory_space<vmem>>, %arg3: memref<1x128xf32, #tpu.memory_space<vmem>>, %arg4: memref<512x128xf32, #tpu.memory_space<vmem>>) attributes {dimension_semantics = [#tpu.dimension_semantics<parallel>], iteration_bounds = array<i64: 1>, scalar_prefetch = 0 : i64, scratch_operands = 0 : i64, tpu.core_type = #tpu.core_type<tc>, window_params = [{transform_indices = @transform_0, window_bounds = array<i64: 512, 288>}, {pipeline_mode = #tpu.pipeline_mode<synchronous>, transform_indices = @transform_1, window_bounds = array<i64: 288, 128>}, {pipeline_mode = #tpu.pipeline_mode<synchronous>, transform_indices = @transform_2, window_bounds = array<i64: 1, 128>}, {transform_indices = @transform_3, window_bounds = array<i64: 512, 128>}]} {
    %c0 = arith.constant 0 : index
    %c0_0 = arith.constant 0 : index
    %0 = vector.load %arg1[%c0, %c0_0] : memref<512x288xbf16, #tpu.memory_space<vmem>>, vector<512x288xbf16>
    %c0_1 = arith.constant 0 : index
    %c0_2 = arith.constant 0 : index
    %1 = vector.load %arg2[%c0_1, %c0_2] : memref<288x128xbf16, #tpu.memory_space<vmem>>, vector<288x128xbf16>
    %cst = arith.constant dense<0.000000e+00> : vector<512x128xf32>
    %2 = tpu.matmul %0, %1, %cst {dimension_numbers = #tpu.dot_dimension_numbers<[1], [0], [0], [1], [0, 0, 1, 1], [], []>} : vector<512x288xbf16>, vector<288x128xbf16>, vector<512x128xf32> -> vector<512x128xf32>
    %c0_3 = arith.constant 0 : index
    %c0_4 = arith.constant 0 : index
    %3 = vector.load %arg3[%c0_3, %c0_4] : memref<1x128xf32, #tpu.memory_space<vmem>>, vector<1x128xf32>
    %4 = vector.broadcast %3 : vector<1x128xf32> to vector<512x128xf32>
    %5 = arith.addf %2, %4 : vector<512x128xf32>
    %c0_5 = arith.constant 0 : index
    %c0_6 = arith.constant 0 : index
    %6 = vector.load %arg4[%c0_5, %c0_6] : memref<512x128xf32, #tpu.memory_space<vmem>>, vector<512x128xf32>
    tpu.vector_store %arg4[%c0_5, %c0_6], %5 {strides = array<i32>} : memref<512x128xf32, #tpu.memory_space<vmem>>, vector<512x128xf32>,
    return
  }
  func.func @transform_0(%arg0: i32) -> (i32, i32) {
    %c0_i32 = arith.constant 0 : i32
    %c0_i32_0 = arith.constant 0 : i32
    return %arg0, %c0_i32 : i32, i32
  }
  func.func @transform_1(%arg0: i32) -> (i32, i32) {
    %c0_i32 = arith.constant 0 : i32
    %c0_i32_0 = arith.constant 0 : i32
    %c0_i32_1 = arith.constant 0 : i32
    return %c0_i32, %c0_i32_0 : i32, i32
  }
  func.func @transform_2(%arg0: i32) -> (i32, i32) {
    %c0_i32 = arith.constant 0 : i32
    %c0_i32_0 = arith.constant 0 : i32
    %c0_i32_1 = arith.constant 0 : i32
    return %c0_i32, %c0_i32_0 : i32, i32
  }
  func.func @transform_3(%arg0: i32) -> (i32, i32) {
    %c0_i32 = arith.constant 0 : i32
    %c0_i32_0 = arith.constant 0 : i32
    return %arg0, %c0_i32 : i32, i32
  }
}

</mosaic_0001>

<llo_original>
// kernel: gfocal_heads_forward.1
$region0: #{gfocal_heads_forward.1}
  #allocation0 [shape = 'u32[]', space=smem, size = 0x4, offset = 0x4, fixed_abs, tag = 'smem constant byte address 0x4 - core index']
  #allocation1 [shape = 'u32[72,128]{1,0:T(1,128)}', space=vmem, size = 0x9000, scoped, tag = 'internal scratch']
  %s0 = inlined_call_operand.vmem [shape: bf16[512,288], index: 0, kind: input, shape index: {}]
  %s1 = inlined_call_operand.vmem [shape: bf16[288,128], index: 1, kind: input, shape index: {}]
  %s2 = inlined_call_operand.vmem [shape: f32[1,128], index: 2, kind: input, shape index: {}]
  %s3 = inlined_call_operand.vmem [shape: f32[512,128], index: 3, kind: output, shape index: {}]
  %s4 = sld [smem:[#allocation0]]
  $region22: #{gfocal_heads_forward.1} parent=0
    _
  %s6 = ssub.s32 1, %s4
  %s7 = scalar_select 0, %s6, %s4
  // Predicated region
  $region2: #{gfocal_heads_forward.1} parent=0 // pred_check
    _
  $region3: #{gfocal_heads_forward.1} parent=0 // pred_check_branch
    %9 = sbr.rel (0) target = $region5
  $region4: #{gfocal_heads_forward.1} parent=0 // pred_region
    _
  $region5: #{gfocal_heads_forward.1} parent=0 // pred_fallthru
    _
  // Predicated region
  $region6: #{gfocal_heads_forward.1} parent=0 // pred_check
    _
  $region7: #{gfocal_heads_forward.1} parent=0 // pred_check_branch
    %11 = sbr.rel (0) target = $region9
  $region8: #{gfocal_heads_forward.1} parent=0 // pred_region
    _
  $region9: #{gfocal_heads_forward.1} parent=0 // pred_fallthru
    _
  // Predicated region
  $region10: #{gfocal_heads_forward.1} parent=0 // pred_check
    _
  $region11: #{gfocal_heads_forward.1} parent=0 // pred_check_branch
    %13 = sbr.rel (0) target = $region13
  $region12: #{gfocal_heads_forward.1} parent=0 // pred_region
    _
  $region13: #{gfocal_heads_forward.1} parent=0 // pred_fallthru
    _
  %v15 = vld [vmem:[%s0] sm:$0xff]
  %v16 = vld [vmem:[%s0 + $0x8] sm:$0xf]
  %v17 = vld [vmem:[%s0 + $0xc] sm:$0xff]
  %v18 = vld [vmem:[%s0 + $0x14] sm:$0xf]
  %v19 = vld [vmem:[%s0 + $0x18] sm:$0xff]
  %v20 = vld [vmem:[%s0 + $0x20] sm:$0xf]
  %v21 = vld [vmem:[%s0 + $0x24] sm:$0xff]
  %v22 = vld [vmem:[%s0 + $0x2c] sm:$0xf]
  %v23 = vld [vmem:[%s0 + $0x30] sm:$0xff]
  %v24 = vld [vmem:[%s0 + $0x38] sm:$0xf]
  %v25 = vld [vmem:[%s0 + $0x3c] sm:$0xff]
  %v26 = vld [vmem:[%s0 + $0x44] sm:$0xf]
  %v27 = vld [vmem:[%s0 + $0x48] sm:$0xff]
  %v28 = vld [vmem:[%s0 + $0x50] sm:$0xf]
  %v29 = vld [vmem:[%s0 + $0x54] sm:$0xff]
  %v30 = vld [vmem:[%s0 + $0x5c] sm:$0xf]
  %v31 = vld [vmem:[%s0 + $0x60] sm:$0xff]
  %v32 = vld [vmem:[%s0 + $0x68] sm:$0xf]
  %v33 = vld [vmem:[%s0 + $0x6c] sm:$0xff]
  %v34 = vld [vmem:[%s0 + $0x74] sm:$0xf]
  %v35 = vld [vmem:[%s0 + $0x78] sm:$0xff]
  %v36 = vld [vmem:[%s0 + $0x80] sm:$0xf]
  %v37 = vld [vmem:[%s0 + $0x84] sm:$0xff]
  %v38 = vld [vmem:[%s0 + $0x8c] sm:$0xf]
  %v39 = vld [vmem:[%s0 + $0x90] sm:$0xff]
  %v40 = vld [vmem:[%s0 + $0x98] sm:$0xf]
  %v41 = vld [vmem:[%s0 + $0x9c] sm:$0xff]
  %v42 = vld [vmem:[%s0 + $0xa4] sm:$0xf]
  %v43 = vld [vmem:[%s0 + $0xa8] sm:$0xff]
  %v44 = vld [vmem:[%s0 + $0xb0] sm:$0xf]
  %v45 = vld [vmem:[%s0 + $0xb4] sm:$0xff]
  %v46 = vld [vmem:[%s0 + $0xbc] sm:$0xf]
  %v47 = vld [vmem:[%s0 + $0xc0] sm:$0xff]
  %v48 = vld [vmem:[%s0 + $0xc8] sm:$0xf]
  %v49 = vld [vmem:[%s0 + $0xcc] sm:$0xff]
  %v50 = vld [vmem:[%s0 + $0xd4] sm:$0xf]
  %v51 = vld [vmem:[%s0 + $0xd8] sm:$0xff]
  %v52 = vld [vmem:[%s0 + $0xe0] sm:$0xf]
  %v53 = vld [vmem:[%s0 + $0xe4] sm:$0xff]
  %v54 = vld [vmem:[%s0 + $0xec] sm:$0xf]
  %v55 = vld [vmem:[%s0 + $0xf0] sm:$0xff]
  %v56 = vld [vmem:[%s0 + $0xf8] sm:$0xf]
  %v57 = vld [vmem:[%s0 + $0xfc] sm:$0xff]
  %v58 = vld [vmem:[%s0 + $0x104] sm:$0xf]
  %v59 = vld [vmem:[%s0 + $0x108] sm:$0xff]
  %v60 = vld [vmem:[%s0 + $0x110] sm:$0xf]
  %v61 = vld [vmem:[%s0 + $0x114] sm:$0xff]
  %v62 = vld [vmem:[%s0 + $0x11c] sm:$0xf]
  %v63 = vld [vmem:[%s0 + $0x120] sm:$0xff]
  %v64 = vld [vmem:[%s0 + $0x128] sm:$0xf]
  %v65 = vld [vmem:[%s0 + $0x12c] sm:$0xff]
  %v66 = vld [vmem:[%s0 + $0x134] sm:$0xf]
  %v67 = vld [vmem:[%s0 + $0x138] sm:$0xff]
  %v68 = vld [vmem:[%s0 + $0x140] sm:$0xf]
  %v69 = vld [vmem:[%s0 + $0x144] sm:$0xff]
  %v70 = vld [vmem:[%s0 + $0x14c] sm:$0xf]
  %v71 = vld [vmem:[%s0 + $0x150] sm:$0xff]
  %v72 = vld [vmem:[%s0 + $0x158] sm:$0xf]
  %v73 = vld [vmem:[%s0 + $0x15c] sm:$0xff]
  %v74 = vld [vmem:[%s0 + $0x164] sm:$0xf]
  %v75 = vld [vmem:[%s0 + $0x168] sm:$0xff]
  %v76 = vld [vmem:[%s0 + $0x170] sm:$0xf]
  %v77 = vld [vmem:[%s0 + $0x174] sm:$0xff]
  %v78 = vld [vmem:[%s0 + $0x17c] sm:$0xf]
  %v79 = vld [vmem:[%s0 + $0x180] sm:$0xff]
  %v80 = vld [vmem:[%s0 + $0x188] sm:$0xf]
  %v81 = vld [vmem:[%s0 + $0x18c] sm:$0xff]
  %v82 = vld [vmem:[%s0 + $0x194] sm:$0xf]
  %v83 = vld [vmem:[%s0 + $0x198] sm:$0xff]
  %v84 = vld [vmem:[%s0 + $0x1a0] sm:$0xf]
  %v85 = vld [vmem:[%s0 + $0x1a4] sm:$0xff]
  %v86 = vld [vmem:[%s0 + $0x1ac] sm:$0xf]
  %v87 = vld [vmem:[%s0 + $0x1b0] sm:$0xff]
  %v88 = vld [vmem:[%s0 + $0x1b8] sm:$0xf]
  %v89 = vld [vmem:[%s0 + $0x1bc] sm:$0xff]
  %v90 = vld [vmem:[%s0 + $0x1c4] sm:$0xf]
  %v91 = vld [vmem:[%s0 + $0x1c8] sm:$0xff]
  %v92 = vld [vmem:[%s0 + $0x1d0] sm:$0xf]
  %v93 = vld [vmem:[%s0 + $0x1d4] sm:$0xff]
  %v94 = vld [vmem:[%s0 + $0x1dc] sm:$0xf]
  %v95 = vld [vmem:[%s0 + $0x1e0] sm:$0xff]
  %v96 = vld [vmem:[%s0 + $0x1e8] sm:$0xf]
  %v97 = vld [vmem:[%s0 + $0x1ec] sm:$0xff]
  %v98 = vld [vmem:[%s0 + $0x1f4] sm:$0xf]
  %v99 = vld [vmem:[%s0 + $0x1f8] sm:$0xff]
  %v100 = vld [vmem:[%s0 + $0x200] sm:$0xf]
  %v101 = vld [vmem:[%s0 + $0x204] sm:$0xff]
  %v102 = vld [vmem:[%s0 + $0x20c] sm:$0xf]
  %v103 = vld [vmem:[%s0 + $0x210] sm:$0xff]
  %v104 = vld [vmem:[%s0 + $0x218] sm:$0xf]
  %v105 = vld [vmem:[%s0 + $0x21c] sm:$0xff]
  %v106 = vld [vmem:[%s0 + $0x224] sm:$0xf]
  %v107 = vld [vmem:[%s0 + $0x228] sm:$0xff]
  %v108 = vld [vmem:[%s0 + $0x230] sm:$0xf]
  %v109 = vld [vmem:[%s0 + $0x234] sm:$0xff]
  %v110 = vld [vmem:[%s0 + $0x23c] sm:$0xf]
  %v111 = vld [vmem:[%s0 + $0x240] sm:$0xff]
  %v112 = vld [vmem:[%s0 + $0x248] sm:$0xf]
  %v113 = vld [vmem:[%s0 + $0x24c] sm:$0xff]
  %v114 = vld [vmem:[%s0 + $0x254] sm:$0xf]
  %v115 = vld [vmem:[%s0 + $0x258] sm:$0xff]
  %v116 = vld [vmem:[%s0 + $0x260] sm:$0xf]
  %v117 = vld [vmem:[%s0 + $0x264] sm:$0xff]
  %v118 = vld [vmem:[%s0 + $0x26c] sm:$0xf]
  %v119 = vld [vmem:[%s0 + $0x270] sm:$0xff]
  %v120 = vld [vmem:[%s0 + $0x278] sm:$0xf]
  %v121 = vld [vmem:[%s0 + $0x27c] sm:$0xff]
  %v122 = vld [vmem:[%s0 + $0x284] sm:$0xf]
  %v123 = vld [vmem:[%s0 + $0x288] sm:$0xff]
  %v124 = vld [vmem:[%s0 + $0x290] sm:$0xf]
  %v125 = vld [vmem:[%s0 + $0x294] sm:$0xff]
  %v126 = vld [vmem:[%s0 + $0x29c] sm:$0xf]
  %v127 = vld [vmem:[%s0 + $0x2a0] sm:$0xff]
  %v128 = vld [vmem:[%s0 + $0x2a8] sm:$0xf]
  %v129 = vld [vmem:[%s0 + $0x2ac] sm:$0xff]
  %v130 = vld [vmem:[%s0 + $0x2b4] sm:$0xf]
  %v131 = vld [vmem:[%s0 + $0x2b8] sm:$0xff]
  %v132 = vld [vmem:[%s0 + $0x2c0] sm:$0xf]
  %v133 = vld [vmem:[%s0 + $0x2c4] sm:$0xff]
  %v134 = vld [vmem:[%s0 + $0x2cc] sm:$0xf]
  %v135 = vld [vmem:[%s0 + $0x2d0] sm:$0xff]
  %v136 = vld [vmem:[%s0 + $0x2d8] sm:$0xf]
  %v137 = vld [vmem:[%s0 + $0x2dc] sm:$0xff]
  %v138 = vld [vmem:[%s0 + $0x2e4] sm:$0xf]
  %v139 = vld [vmem:[%s0 + $0x2e8] sm:$0xff]
  %v140 = vld [vmem:[%s0 + $0x2f0] sm:$0xf]
  %v141 = vld [vmem:[%s0 + $0x2f4] sm:$0xff]
  %v142 = vld [vmem:[%s0 + $0x2fc] sm:$0xf]
  %v143 = vld [vmem:[%s1] sm:$0xf]
  %v144 = vld [vmem:[%s1 + $0x4] sm:$0xf]
  %v145 = vld [vmem:[%s1 + $0x8] sm:$0xf]
  %v146 = vld [vmem:[%s1 + $0xc] sm:$0xf]
  %v147 = vld [vmem:[%s1 + $0x10] sm:$0xf]
  %v148 = vld [vmem:[%s1 + $0x14] sm:$0xf]
  %v149 = vld [vmem:[%s1 + $0x18] sm:$0xf]
  %v150 = vld [vmem:[%s1 + $0x1c] sm:$0xf]
  %v151 = vld [vmem:[%s1 + $0x20] sm:$0xf]
  %v152 = vld [vmem:[%s1 + $0x24] sm:$0xf]
  %v153 = vld [vmem:[%s1 + $0x28] sm:$0xf]
  %v154 = vld [vmem:[%s1 + $0x2c] sm:$0xf]
  %v155 = vld [vmem:[%s1 + $0x30] sm:$0xf]
  %v156 = vld [vmem:[%s1 + $0x34] sm:$0xf]
  %v157 = vld [vmem:[%s1 + $0x38] sm:$0xf]
  %v158 = vld [vmem:[%s1 + $0x3c] sm:$0xf]
  %v159 = vld [vmem:[%s1 + $0x40] sm:$0xf]
  %v160 = vld [vmem:[%s1 + $0x44] sm:$0xf]
  %v161 = vld [vmem:[%s1 + $0x48] sm:$0xf]
  %v162 = vld [vmem:[%s1 + $0x4c] sm:$0xf]
  %v163 = vld [vmem:[%s1 + $0x50] sm:$0xf]
  %v164 = vld [vmem:[%s1 + $0x54] sm:$0xf]
  %v165 = vld [vmem:[%s1 + $0x58] sm:$0xf]
  %v166 = vld [vmem:[%s1 + $0x5c] sm:$0xf]
  %v167 = vld [vmem:[%s1 + $0x60] sm:$0xf]
  %v168 = vld [vmem:[%s1 + $0x64] sm:$0xf]
  %v169 = vld [vmem:[%s1 + $0x68] sm:$0xf]
  %v170 = vld [vmem:[%s1 + $0x6c] sm:$0xf]
  %v171 = vld [vmem:[%s1 + $0x70] sm:$0xf]
  %v172 = vld [vmem:[%s1 + $0x74] sm:$0xf]
  %v173 = vld [vmem:[%s1 + $0x78] sm:$0xf]
  %v174 = vld [vmem:[%s1 + $0x7c] sm:$0xf]
  %v175 = vld [vmem:[%s1 + $0x80] sm:$0xf]
  %v176 = vld [vmem:[%s1 + $0x84] sm:$0xf]
  %v177 = vld [vmem:[%s1 + $0x88] sm:$0xf]
  %v178 = vld [vmem:[%s1 + $0x8c] sm:$0xf]
  %v179 = vld [vmem:[%s2] sm:$0x1]
  %v181 = vperm.slane %v179, 0
  %v311 = vunpack.c.l.b16 %v15
  %v312 = vunpack.c.h.b16 %v15
  %v313 = vunpack.c.l.b16 %v16
  %v314 = vunpack.c.l.b16 %v17
  %v315 = vunpack.c.h.b16 %v17
  %v316 = vunpack.c.l.b16 %v18
  %v317 = vunpack.c.l.b16 %v19
  %v318 = vunpack.c.h.b16 %v19
  %v319 = vunpack.c.l.b16 %v20
  %v320 = vunpack.c.l.b16 %v21
  %v321 = vunpack.c.h.b16 %v21
  %v322 = vunpack.c.l.b16 %v22
  %v323 = vunpack.c.l.b16 %v23
  %v324 = vunpack.c.h.b16 %v23
  %v325 = vunpack.c.l.b16 %v24
  %v326 = vunpack.c.l.b16 %v25
  %v327 = vunpack.c.h.b16 %v25
  %v328 = vunpack.c.l.b16 %v26
  %v329 = vunpack.c.l.b16 %v27
  %v330 = vunpack.c.h.b16 %v27
  %v331 = vunpack.c.l.b16 %v28
  %v332 = vunpack.c.l.b16 %v29
  %v333 = vunpack.c.h.b16 %v29
  %v334 = vunpack.c.l.b16 %v30
  %v335 = vunpack.c.l.b16 %v31
  %v336 = vunpack.c.h.b16 %v31
  %v337 = vunpack.c.l.b16 %v32
  %v338 = vunpack.c.l.b16 %v33
  %v339 = vunpack.c.h.b16 %v33
  %v340 = vunpack.c.l.b16 %v34
  %v341 = vunpack.c.l.b16 %v35
  %v342 = vunpack.c.h.b16 %v35
  %v343 = vunpack.c.l.b16 %v36
  %v344 = vunpack.c.l.b16 %v37
  %v345 = vunpack.c.h.b16 %v37
  %v346 = vunpack.c.l.b16 %v38
  %v347 = vunpack.c.l.b16 %v39
  %v348 = vunpack.c.h.b16 %v39
  %v349 = vunpack.c.l.b16 %v40
  %v350 = vunpack.c.l.b16 %v41
  %v351 = vunpack.c.h.b16 %v41
  %v352 = vunpack.c.l.b16 %v42
  %v353 = vunpack.c.l.b16 %v43
  %v354 = vunpack.c.h.b16 %v43
  %v355 = vunpack.c.l.b16 %v44
  %v356 = vunpack.c.l.b16 %v45
  %v357 = vunpack.c.h.b16 %v45
  %v358 = vunpack.c.l.b16 %v46
  %v359 = vunpack.c.l.b16 %v47
  %v360 = vunpack.c.h.b16 %v47
  %v361 = vunpack.c.l.b16 %v48
  %v362 = vunpack.c.l.b16 %v49
  %v363 = vunpack.c.h.b16 %v49
  %v364 = vunpack.c.l.b16 %v50
  %v365 = vunpack.c.l.b16 %v51
  %v366 = vunpack.c.h.b16 %v51
  %v367 = vunpack.c.l.b16 %v52
  %v368 = vunpack.c.l.b16 %v53
  %v369 = vunpack.c.h.b16 %v53
  %v370 = vunpack.c.l.b16 %v54
  %v371 = vunpack.c.l.b16 %v55
  %v372 = vunpack.c.h.b16 %v55
  %v373 = vunpack.c.l.b16 %v56
  %v374 = vunpack.c.l.b16 %v57
  %v375 = vunpack.c.h.b16 %v57
  %v376 = vunpack.c.l.b16 %v58
  %v377 = vunpack.c.l.b16 %v59
  %v378 = vunpack.c.h.b16 %v59
  %v379 = vunpack.c.l.b16 %v60
  %v380 = vunpack.c.l.b16 %v61
  %v381 = vunpack.c.h.b16 %v61
  %v382 = vunpack.c.l.b16 %v62
  %v383 = vunpack.c.l.b16 %v63
  %v384 = vunpack.c.h.b16 %v63
  %v385 = vunpack.c.l.b16 %v64
  %v386 = vunpack.c.l.b16 %v65
  %v387 = vunpack.c.h.b16 %v65
  %v388 = vunpack.c.l.b16 %v66
  %v389 = vunpack.c.l.b16 %v67
  %v390 = vunpack.c.h.b16 %v67
  %v391 = vunpack.c.l.b16 %v68
  %v392 = vunpack.c.l.b16 %v69
  %v393 = vunpack.c.h.b16 %v69
  %v394 = vunpack.c.l.b16 %v70
  %v395 = vunpack.c.l.b16 %v71
  %v396 = vunpack.c.h.b16 %v71
  %v397 = vunpack.c.l.b16 %v72
  %v398 = vunpack.c.l.b16 %v73
  %v399 = vunpack.c.h.b16 %v73
  %v400 = vunpack.c.l.b16 %v74
  %v401 = vunpack.c.l.b16 %v75
  %v402 = vunpack.c.h.b16 %v75
  %v403 = vunpack.c.l.b16 %v76
  %v404 = vunpack.c.l.b16 %v77
  %v405 = vunpack.c.h.b16 %v77
  %v406 = vunpack.c.l.b16 %v78
  %v407 = vunpack.c.l.b16 %v79
  %v408 = vunpack.c.h.b16 %v79
  %v409 = vunpack.c.l.b16 %v80
  %v410 = vunpack.c.l.b16 %v81
  %v411 = vunpack.c.h.b16 %v81
  %v412 = vunpack.c.l.b16 %v82
  %v413 = vunpack.c.l.b16 %v83
  %v414 = vunpack.c.h.b16 %v83
  %v415 = vunpack.c.l.b16 %v84
  %v416 = vunpack.c.l.b16 %v85
  %v417 = vunpack.c.h.b16 %v85
  %v418 = vunpack.c.l.b16 %v86
  %v419 = vunpack.c.l.b16 %v87
  %v420 = vunpack.c.h.b16 %v87
  %v421 = vunpack.c.l.b16 %v88
  %v422 = vunpack.c.l.b16 %v89
  %v423 = vunpack.c.h.b16 %v89
  %v424 = vunpack.c.l.b16 %v90
  %v425 = vunpack.c.l.b16 %v91
  %v426 = vunpack.c.h.b16 %v91
  %v427 = vunpack.c.l.b16 %v92
  %v428 = vunpack.c.l.b16 %v93
  %v429 = vunpack.c.h.b16 %v93
  %v430 = vunpack.c.l.b16 %v94
  %v431 = vunpack.c.l.b16 %v95
  %v432 = vunpack.c.h.b16 %v95
  %v433 = vunpack.c.l.b16 %v96
  %v434 = vunpack.c.l.b16 %v97
  %v435 = vunpack.c.h.b16 %v97
  %v436 = vunpack.c.l.b16 %v98
  %v437 = vunpack.c.l.b16 %v99
  %v438 = vunpack.c.h.b16 %v99
  %v439 = vunpack.c.l.b16 %v100
  %v440 = vunpack.c.l.b16 %v101
  %v441 = vunpack.c.h.b16 %v101
  %v442 = vunpack.c.l.b16 %v102
  %v443 = vunpack.c.l.b16 %v103
  %v444 = vunpack.c.h.b16 %v103
  %v445 = vunpack.c.l.b16 %v104
  %v446 = vunpack.c.l.b16 %v105
  %v447 = vunpack.c.h.b16 %v105
  %v448 = vunpack.c.l.b16 %v106
  %v449 = vunpack.c.l.b16 %v107
  %v450 = vunpack.c.h.b16 %v107
  %v451 = vunpack.c.l.b16 %v108
  %v452 = vunpack.c.l.b16 %v109
  %v453 = vunpack.c.h.b16 %v109
  %v454 = vunpack.c.l.b16 %v110
  %v455 = vunpack.c.l.b16 %v111
  %v456 = vunpack.c.h.b16 %v111
  %v457 = vunpack.c.l.b16 %v112
  %v458 = vunpack.c.l.b16 %v113
  %v459 = vunpack.c.h.b16 %v113
  %v460 = vunpack.c.l.b16 %v114
  %v461 = vunpack.c.l.b16 %v115
  %v462 = vunpack.c.h.b16 %v115
  %v463 = vunpack.c.l.b16 %v116
  %v464 = vunpack.c.l.b16 %v117
  %v465 = vunpack.c.h.b16 %v117
  %v466 = vunpack.c.l.b16 %v118
  %v467 = vunpack.c.l.b16 %v119
  %v468 = vunpack.c.h.b16 %v119
  %v469 = vunpack.c.l.b16 %v120
  %v470 = vunpack.c.l.b16 %v121
  %v471 = vunpack.c.h.b16 %v121
  %v472 = vunpack.c.l.b16 %v122
  %v473 = vunpack.c.l.b16 %v123
  %v474 = vunpack.c.h.b16 %v123
  %v475 = vunpack.c.l.b16 %v124
  %v476 = vunpack.c.l.b16 %v125
  %v477 = vunpack.c.h.b16 %v125
  %v478 = vunpack.c.l.b16 %v126
  %v479 = vunpack.c.l.b16 %v127
  %v480 = vunpack.c.h.b16 %v127
  %v481 = vunpack.c.l.b16 %v128
  %v482 = vunpack.c.l.b16 %v129
  %v483 = vunpack.c.h.b16 %v129
  %v484 = vunpack.c.l.b16 %v130
  %v485 = vunpack.c.l.b16 %v131
  %v486 = vunpack.c.h.b16 %v131
  %v487 = vunpack.c.l.b16 %v132
  %v488 = vunpack.c.l.b16 %v133
  %v489 = vunpack.c.h.b16 %v133
  %v490 = vunpack.c.l.b16 %v134
  %v491 = vunpack.c.l.b16 %v135
  %v492 = vunpack.c.h.b16 %v135
  %v493 = vunpack.c.l.b16 %v136
  %v494 = vunpack.c.l.b16 %v137
  %v495 = vunpack.c.h.b16 %v137
  %v496 = vunpack.c.l.b16 %v138
  %v497 = vunpack.c.l.b16 %v139
  %v498 = vunpack.c.h.b16 %v139
  %v499 = vunpack.c.l.b16 %v140
  %v500 = vunpack.c.l.b16 %v141
  %v501 = vunpack.c.h.b16 %v141
  %v502 = vunpack.c.l.b16 %v142
  %v503 = vpack.c.b16 %v314, %v311
  %v504 = vpack.c.b16 %v315, %v312
  %v505 = vpack.c.b16 %v316, %v313
  %v506 = vpack.c.b16 %v320, %v317
  %v507 = vpack.c.b16 %v321, %v318
  %v508 = vpack.c.b16 %v322, %v319
  %v509 = vpack.c.b16 %v326, %v323
  %v510 = vpack.c.b16 %v327, %v324
  %v511 = vpack.c.b16 %v328, %v325
  %v512 = vpack.c.b16 %v332, %v329
  %v513 = vpack.c.b16 %v333, %v330
  %v514 = vpack.c.b16 %v334, %v331
  %v515 = vpack.c.b16 %v338, %v335
  %v516 = vpack.c.b16 %v339, %v336
  %v517 = vpack.c.b16 %v340, %v337
  %v518 = vpack.c.b16 %v344, %v341
  %v519 = vpack.c.b16 %v345, %v342
  %v520 = vpack.c.b16 %v346, %v343
  %v521 = vpack.c.b16 %v350, %v347
  %v522 = vpack.c.b16 %v351, %v348
  %v523 = vpack.c.b16 %v352, %v349
  %v524 = vpack.c.b16 %v356, %v353
  %v525 = vpack.c.b16 %v357, %v354
  %v526 = vpack.c.b16 %v358, %v355
  %v527 = vpack.c.b16 %v362, %v359
  %v528 = vpack.c.b16 %v363, %v360
  %v529 = vpack.c.b16 %v364, %v361
  %v530 = vpack.c.b16 %v368, %v365
  %v531 = vpack.c.b16 %v369, %v366
  %v532 = vpack.c.b16 %v370, %v367
  %v533 = vpack.c.b16 %v374, %v371
  %v534 = vpack.c.b16 %v375, %v372
  %v535 = vpack.c.b16 %v376, %v373
  %v536 = vpack.c.b16 %v380, %v377
  %v537 = vpack.c.b16 %v381, %v378
  %v538 = vpack.c.b16 %v382, %v379
  %v539 = vpack.c.b16 %v386, %v383
  %v540 = vpack.c.b16 %v387, %v384
  %v541 = vpack.c.b16 %v388, %v385
  %v542 = vpack.c.b16 %v392, %v389
  %v543 = vpack.c.b16 %v393, %v390
  %v544 = vpack.c.b16 %v394, %v391
  %v545 = vpack.c.b16 %v398, %v395
  %v546 = vpack.c.b16 %v399, %v396
  %v547 = vpack.c.b16 %v400, %v397
  %v548 = vpack.c.b16 %v404, %v401
  %v549 = vpack.c.b16 %v405, %v402
  %v550 = vpack.c.b16 %v406, %v403
  %v551 = vpack.c.b16 %v410, %v407
  %v552 = vpack.c.b16 %v411, %v408
  %v553 = vpack.c.b16 %v412, %v409
  %v554 = vpack.c.b16 %v416, %v413
  %v555 = vpack.c.b16 %v417, %v414
  %v556 = vpack.c.b16 %v418, %v415
  %v557 = vpack.c.b16 %v422, %v419
  %v558 = vpack.c.b16 %v423, %v420
  %v559 = vpack.c.b16 %v424, %v421
  %v560 = vpack.c.b16 %v428, %v425
  %v561 = vpack.c.b16 %v429, %v426
  %v562 = vpack.c.b16 %v430, %v427
  %v563 = vpack.c.b16 %v434, %v431
  %v564 = vpack.c.b16 %v435, %v432
  %v565 = vpack.c.b16 %v436, %v433
  %v566 = vpack.c.b16 %v440, %v437
  %v567 = vpack.c.b16 %v441, %v438
  %v568 = vpack.c.b16 %v442, %v439
  %v569 = vpack.c.b16 %v446, %v443
  %v570 = vpack.c.b16 %v447, %v444
  %v571 = vpack.c.b16 %v448, %v445
  %v572 = vpack.c.b16 %v452, %v449
  %v573 = vpack.c.b16 %v453, %v450
  %v574 = vpack.c.b16 %v454, %v451
  %v575 = vpack.c.b16 %v458, %v455
  %v576 = vpack.c.b16 %v459, %v456
  %v577 = vpack.c.b16 %v460, %v457
  %v578 = vpack.c.b16 %v464, %v461
  %v579 = vpack.c.b16 %v465, %v462
  %v580 = vpack.c.b16 %v466, %v463
  %v581 = vpack.c.b16 %v470, %v467
  %v582 = vpack.c.b16 %v471, %v468
  %v583 = vpack.c.b16 %v472, %v469
  %v584 = vpack.c.b16 %v476, %v473
  %v585 = vpack.c.b16 %v477, %v474
  %v586 = vpack.c.b16 %v478, %v475
  %v587 = vpack.c.b16 %v482, %v479
  %v588 = vpack.c.b16 %v483, %v480
  %v589 = vpack.c.b16 %v484, %v481
  %v590 = vpack.c.b16 %v488, %v485
  %v591 = vpack.c.b16 %v489, %v486
  %v592 = vpack.c.b16 %v490, %v487
  %v593 = vpack.c.b16 %v494, %v491
  %v594 = vpack.c.b16 %v495, %v492
  %v595 = vpack.c.b16 %v496, %v493
  %v596 = vpack.c.b16 %v500, %v497
  %v597 = vpack.c.b16 %v501, %v498
  %v598 = vpack.c.b16 %v502, %v499
  %v699 = vunpack.c.l.b16 %v143
  %v700 = vunpack.c.l.b16 %v144
  %v701 = vunpack.c.l.b16 %v145
  %v702 = vunpack.c.l.b16 %v146
  %v703 = vunpack.c.l.b16 %v147
  %v704 = vunpack.c.l.b16 %v148
  %v705 = vunpack.c.l.b16 %v149
  %v706 = vunpack.c.l.b16 %v150
  %v707 = vunpack.c.l.b16 %v151
  %v708 = vunpack.c.l.b16 %v152
  %v709 = vunpack.c.l.b16 %v153
  %v710 = vunpack.c.l.b16 %v154
  %v711 = vunpack.c.l.b16 %v155
  %v712 = vunpack.c.l.b16 %v156
  %v713 = vunpack.c.l.b16 %v157
  %v714 = vunpack.c.l.b16 %v158
  %v715 = vunpack.c.l.b16 %v159
  %v716 = vunpack.c.l.b16 %v160
  %v717 = vunpack.c.l.b16 %v161
  %v718 = vunpack.c.l.b16 %v162
  %v719 = vunpack.c.l.b16 %v163
  %v720 = vunpack.c.l.b16 %v164
  %v721 = vunpack.c.l.b16 %v165
  %v722 = vunpack.c.l.b16 %v166
  %v723 = vunpack.c.l.b16 %v167
  %v724 = vunpack.c.l.b16 %v168
  %v725 = vunpack.c.l.b16 %v169
  %v726 = vunpack.c.l.b16 %v170
  %v727 = vunpack.c.l.b16 %v171
  %v728 = vunpack.c.l.b16 %v172
  %v729 = vunpack.c.l.b16 %v173
  %v730 = vunpack.c.l.b16 %v174
  %v731 = vunpack.c.l.b16 %v175
  %v732 = vunpack.c.l.b16 %v176
  %v733 = vunpack.c.l.b16 %v177
  %v734 = vunpack.c.l.b16 %v178
  %v735 = vpack.c.b16 %v700, %v699
  %v736 = vpack.c.b16 %v702, %v701
  %v737 = vpack.c.b16 %v704, %v703
  %v738 = vpack.c.b16 %v706, %v705
  %v739 = vpack.c.b16 %v708, %v707
  %v740 = vpack.c.b16 %v710, %v709
  %v741 = vpack.c.b16 %v712, %v711
  %v742 = vpack.c.b16 %v714, %v713
  %v743 = vpack.c.b16 %v716, %v715
  %v744 = vpack.c.b16 %v718, %v717
  %v745 = vpack.c.b16 %v720, %v719
  %v746 = vpack.c.b16 %v722, %v721
  %v747 = vpack.c.b16 %v724, %v723
  %v748 = vpack.c.b16 %v726, %v725
  %v749 = vpack.c.b16 %v728, %v727
  %v750 = vpack.c.b16 %v730, %v729
  %v751 = vpack.c.b16 %v732, %v731
  %v752 = vpack.c.b16 %v734, %v733
  %vm771 = vcmask 261120
  %v773 = vsel %vm771, %v505, 0
  %v776 = vsel %vm771, %v508, 0
  %v779 = vsel %vm771, %v511, 0
  %v782 = vsel %vm771, %v514, 0
  %v785 = vsel %vm771, %v517, 0
  %v788 = vsel %vm771, %v520, 0
  %v791 = vsel %vm771, %v523, 0
  %v794 = vsel %vm771, %v526, 0
  %v797 = vsel %vm771, %v529, 0
  %v800 = vsel %vm771, %v532, 0
  %v803 = vsel %vm771, %v535, 0
  %v806 = vsel %vm771, %v538, 0
  %v809 = vsel %vm771, %v541, 0
  %v812 = vsel %vm771, %v544, 0
  %v815 = vsel %vm771, %v547, 0
  %v818 = vsel %vm771, %v550, 0
  %v821 = vsel %vm771, %v553, 0
  %v824 = vsel %vm771, %v556, 0
  %v827 = vsel %vm771, %v559, 0
  %v830 = vsel %vm771, %v562, 0
  %v833 = vsel %vm771, %v565, 0
  %v836 = vsel %vm771, %v568, 0
  %v839 = vsel %vm771, %v571, 0
  %v842 = vsel %vm771, %v574, 0
  %v845 = vsel %vm771, %v577, 0
  %v848 = vsel %vm771, %v580, 0
  %v851 = vsel %vm771, %v583, 0
  %v854 = vsel %vm771, %v586, 0
  %v857 = vsel %vm771, %v589, 0
  %v860 = vsel %vm771, %v592, 0
  %v863 = vsel %vm771, %v595, 0
  %v866 = vsel %vm771, %v598, 0
  %868 = vmatpush.bf16.msra.mxu0 %v742
  %869 = vmatpush.bf16.msra.mxu0 %v741
  %870 = vmatpush.bf16.msra.mxu0 %v740
  %871 = vmatpush.bf16.msra.mxu0 %v739
  %872 = vmatpush.bf16.msra.mxu0 %v738
  %873 = vmatpush.bf16.msra.mxu0 %v737
  %874 = vmatpush.bf16.msra.mxu0 %v736
  %875 = vmatpush.bf16.msra.mxu0 %v735
  %876 = vmatmul.bf16.gmra.mxu0 %v503
  %v877 = vpop.f32.mrf.mxu0
  %v878 = vadd.f32 %v181, %v877
  %v879 = vpop.f32.mrf.mxu0
  %v880 = vadd.f32 %v181, %v879
  %881 = vmatmul.bf16.gmra.mxu0 %v506
  %v882 = vpop.f32.mrf.mxu0
  %v883 = vadd.f32 %v181, %v882
  %v884 = vpop.f32.mrf.mxu0
  %v885 = vadd.f32 %v181, %v884
  %886 = vmatmul.bf16.gmra.mxu0 %v509
  %v887 = vpop.f32.mrf.mxu0
  %v888 = vadd.f32 %v181, %v887
  %v889 = vpop.f32.mrf.mxu0
  %v890 = vadd.f32 %v181, %v889
  %891 = vmatmul.bf16.gmra.mxu0 %v512
  %v892 = vpop.f32.mrf.mxu0
  %v893 = vadd.f32 %v181, %v892
  %v894 = vpop.f32.mrf.mxu0
  %v895 = vadd.f32 %v181, %v894
  %896 = vmatmul.bf16.gmra.mxu0 %v515
  %v897 = vpop.f32.mrf.mxu0
  %v898 = vadd.f32 %v181, %v897
  %v899 = vpop.f32.mrf.mxu0
  %v900 = vadd.f32 %v181, %v899
  %901 = vmatmul.bf16.gmra.mxu0 %v518
  %v902 = vpop.f32.mrf.mxu0
  %v903 = vadd.f32 %v181, %v902
  %v904 = vpop.f32.mrf.mxu0
  %v905 = vadd.f32 %v181, %v904
  %906 = vmatmul.bf16.gmra.mxu0 %v521
  %v907 = vpop.f32.mrf.mxu0
  %v908 = vadd.f32 %v181, %v907
  %v909 = vpop.f32.mrf.mxu0
  %v910 = vadd.f32 %v181, %v909
  %911 = vmatmul.bf16.gmra.mxu0 %v524
  %v912 = vpop.f32.mrf.mxu0
  %v913 = vadd.f32 %v181, %v912
  %v914 = vpop.f32.mrf.mxu0
  %v915 = vadd.f32 %v181, %v914
  %916 = vmatmul.bf16.gmra.mxu0 %v527
  %v917 = vpop.f32.mrf.mxu0
  %v918 = vadd.f32 %v181, %v917
  %v919 = vpop.f32.mrf.mxu0
  %v920 = vadd.f32 %v181, %v919
  %921 = vmatmul.bf16.gmra.mxu0 %v530
  %v922 = vpop.f32.mrf.mxu0
  %v923 = vadd.f32 %v181, %v922
  %v924 = vpop.f32.mrf.mxu0
  %v925 = vadd.f32 %v181, %v924
  %926 = vmatmul.bf16.gmra.mxu0 %v533
  %v927 = vpop.f32.mrf.mxu0
  %v928 = vadd.f32 %v181, %v927
  %v929 = vpop.f32.mrf.mxu0
  %v930 = vadd.f32 %v181, %v929
  %931 = vmatmul.bf16.gmra.mxu0 %v536
  %v932 = vpop.f32.mrf.mxu0
  %v933 = vadd.f32 %v181, %v932
  %v934 = vpop.f32.mrf.mxu0
  %v935 = vadd.f32 %v181, %v934
  %936 = vmatmul.bf16.gmra.mxu0 %v539
  %v937 = vpop.f32.mrf.mxu0
  %v938 = vadd.f32 %v181, %v937
  %v939 = vpop.f32.mrf.mxu0
  %v940 = vadd.f32 %v181, %v939
  %941 = vmatmul.bf16.gmra.mxu0 %v542
  %v942 = vpop.f32.mrf.mxu0
  %v943 = vadd.f32 %v181, %v942
  %v944 = vpop.f32.mrf.mxu0
  %v945 = vadd.f32 %v181, %v944
  %946 = vmatmul.bf16.gmra.mxu0 %v545
  %v947 = vpop.f32.mrf.mxu0
  %v948 = vadd.f32 %v181, %v947
  %v949 = vpop.f32.mrf.mxu0
  %v950 = vadd.f32 %v181, %v949
  %951 = vmatmul.bf16.gmra.mxu0 %v548
  %v952 = vpop.f32.mrf.mxu0
  %v953 = vadd.f32 %v181, %v952
  %v954 = vpop.f32.mrf.mxu0
  %v955 = vadd.f32 %v181, %v954
  %956 = vmatmul.bf16.gmra.mxu0 %v551
  %v957 = vpop.f32.mrf.mxu0
  %v958 = vadd.f32 %v181, %v957
  %v959 = vpop.f32.mrf.mxu0
  %v960 = vadd.f32 %v181, %v959
  %961 = vmatmul.bf16.gmra.mxu0 %v554
  %v962 = vpop.f32.mrf.mxu0
  %v963 = vadd.f32 %v181, %v962
  %v964 = vpop.f32.mrf.mxu0
  %v965 = vadd.f32 %v181, %v964
  %966 = vmatmul.bf16.gmra.mxu0 %v557
  %v967 = vpop.f32.mrf.mxu0
  %v968 = vadd.f32 %v181, %v967
  %v969 = vpop.f32.mrf.mxu0
  %v970 = vadd.f32 %v181, %v969
  %971 = vmatmul.bf16.gmra.mxu0 %v560
  %v972 = vpop.f32.mrf.mxu0
  %v973 = vadd.f32 %v181, %v972
  %v974 = vpop.f32.mrf.mxu0
  %v975 = vadd.f32 %v181, %v974
  %976 = vmatmul.bf16.gmra.mxu0 %v563
  %v977 = vpop.f32.mrf.mxu0
  %v978 = vadd.f32 %v181, %v977
  %v979 = vpop.f32.mrf.mxu0
  %v980 = vadd.f32 %v181, %v979
  %981 = vmatmul.bf16.gmra.mxu0 %v566
  %v982 = vpop.f32.mrf.mxu0
  %v983 = vadd.f32 %v181, %v982
  %v984 = vpop.f32.mrf.mxu0
  %v985 = vadd.f32 %v181, %v984
  %986 = vmatmul.bf16.gmra.mxu0 %v569
  %v987 = vpop.f32.mrf.mxu0
  %v988 = vadd.f32 %v181, %v987
  %v989 = vpop.f32.mrf.mxu0
  %v990 = vadd.f32 %v181, %v989
  %991 = vmatmul.bf16.gmra.mxu0 %v572
  %v992 = vpop.f32.mrf.mxu0
  %v993 = vadd.f32 %v181, %v992
  %v994 = vpop.f32.mrf.mxu0
  %v995 = vadd.f32 %v181, %v994
  %996 = vmatmul.bf16.gmra.mxu0 %v575
  %v997 = vpop.f32.mrf.mxu0
  %v998 = vadd.f32 %v181, %v997
  %v999 = vpop.f32.mrf.mxu0
  %v1000 = vadd.f32 %v181, %v999
  %1001 = vmatmul.bf16.gmra.mxu0 %v578
  %v1002 = vpop.f32.mrf.mxu0
  %v1003 = vadd.f32 %v181, %v1002
  %v1004 = vpop.f32.mrf.mxu0
  %v1005 = vadd.f32 %v181, %v1004
  %1006 = vmatmul.bf16.gmra.mxu0 %v581
  %v1007 = vpop.f32.mrf.mxu0
  %v1008 = vadd.f32 %v181, %v1007
  %v1009 = vpop.f32.mrf.mxu0
  %v1010 = vadd.f32 %v181, %v1009
  %1011 = vmatmul.bf16.gmra.mxu0 %v584
  %v1012 = vpop.f32.mrf.mxu0
  %v1013 = vadd.f32 %v181, %v1012
  %v1014 = vpop.f32.mrf.mxu0
  %v1015 = vadd.f32 %v181, %v1014
  %1016 = vmatmul.bf16.gmra.mxu0 %v587
  %v1017 = vpop.f32.mrf.mxu0
  %v1018 = vadd.f32 %v181, %v1017
  %v1019 = vpop.f32.mrf.mxu0
  %v1020 = vadd.f32 %v181, %v1019
  %1021 = vmatmul.bf16.gmra.mxu0 %v590
  %v1022 = vpop.f32.mrf.mxu0
  %v1023 = vadd.f32 %v181, %v1022
  %v1024 = vpop.f32.mrf.mxu0
  %v1025 = vadd.f32 %v181, %v1024
  %1026 = vmatmul.bf16.gmra.mxu0 %v593
  %v1027 = vpop.f32.mrf.mxu0
  %v1028 = vadd.f32 %v181, %v1027
  %v1029 = vpop.f32.mrf.mxu0
  %v1030 = vadd.f32 %v181, %v1029
  %1031 = vmatmul.bf16.gmra.mxu0 %v596
  %v1032 = vpop.f32.mrf.mxu0
  %v1033 = vadd.f32 %v181, %v1032
  %v1034 = vpop.f32.mrf.mxu0
  %v1035 = vadd.f32 %v181, %v1034
  %1036 = vdwg.mxu0
  %1037 = vmatpush.bf16.msra.mxu0 %v750
  %1038 = vmatpush.bf16.msra.mxu0 %v749
  %1039 = vmatpush.bf16.msra.mxu0 %v748
  %1040 = vmatpush.bf16.msra.mxu0 %v747
  %1041 = vmatpush.bf16.msra.mxu0 %v746
  %1042 = vmatpush.bf16.msra.mxu0 %v745
  %1043 = vmatpush.bf16.msra.mxu0 %v744
  %1044 = vmatpush.bf16.msra.mxu0 %v743
  %1045 = vmatmul.bf16.gmra.mxu0 %v504
  %v1046 = vpop.f32.mrf.mxu0
  %v1047 = vadd.f32 %v878, %v1046
  %v1048 = vpop.f32.mrf.mxu0
  %v1049 = vadd.f32 %v880, %v1048
  %1050 = vmatmul.bf16.gmra.mxu0 %v507
  %v1051 = vpop.f32.mrf.mxu0
  %v1052 = vadd.f32 %v883, %v1051
  %v1053 = vpop.f32.mrf.mxu0
  %v1054 = vadd.f32 %v885, %v1053
  %1055 = vmatmul.bf16.gmra.mxu0 %v510
  %v1056 = vpop.f32.mrf.mxu0
  %v1057 = vadd.f32 %v888, %v1056
  %v1058 = vpop.f32.mrf.mxu0
  %v1059 = vadd.f32 %v890, %v1058
  %1060 = vmatmul.bf16.gmra.mxu0 %v513
  %v1061 = vpop.f32.mrf.mxu0
  %v1062 = vadd.f32 %v893, %v1061
  %v1063 = vpop.f32.mrf.mxu0
  %v1064 = vadd.f32 %v895, %v1063
  %1065 = vmatmul.bf16.gmra.mxu0 %v516
  %v1066 = vpop.f32.mrf.mxu0
  %v1067 = vadd.f32 %v898, %v1066
  %v1068 = vpop.f32.mrf.mxu0
  %v1069 = vadd.f32 %v900, %v1068
  %1070 = vmatmul.bf16.gmra.mxu0 %v519
  %v1071 = vpop.f32.mrf.mxu0
  %v1072 = vadd.f32 %v903, %v1071
  %v1073 = vpop.f32.mrf.mxu0
  %v1074 = vadd.f32 %v905, %v1073
  %1075 = vmatmul.bf16.gmra.mxu0 %v522
  %v1076 = vpop.f32.mrf.mxu0
  %v1077 = vadd.f32 %v908, %v1076
  %v1078 = vpop.f32.mrf.mxu0
  %v1079 = vadd.f32 %v910, %v1078
  %1080 = vmatmul.bf16.gmra.mxu0 %v525
  %v1081 = vpop.f32.mrf.mxu0
  %v1082 = vadd.f32 %v913, %v1081
  %v1083 = vpop.f32.mrf.mxu0
  %v1084 = vadd.f32 %v915, %v1083
  %1085 = vmatmul.bf16.gmra.mxu0 %v528
  %v1086 = vpop.f32.mrf.mxu0
  %v1087 = vadd.f32 %v918, %v1086
  %v1088 = vpop.f32.mrf.mxu0
  %v1089 = vadd.f32 %v920, %v1088
  %1090 = vmatmul.bf16.gmra.mxu0 %v531
  %v1091 = vpop.f32.mrf.mxu0
  %v1092 = vadd.f32 %v923, %v1091
  %v1093 = vpop.f32.mrf.mxu0
  %v1094 = vadd.f32 %v925, %v1093
  %1095 = vmatmul.bf16.gmra.mxu0 %v534
  %v1096 = vpop.f32.mrf.mxu0
  %v1097 = vadd.f32 %v928, %v1096
  %v1098 = vpop.f32.mrf.mxu0
  %v1099 = vadd.f32 %v930, %v1098
  %1100 = vmatmul.bf16.gmra.mxu0 %v537
  %v1101 = vpop.f32.mrf.mxu0
  %v1102 = vadd.f32 %v933, %v1101
  %v1103 = vpop.f32.mrf.mxu0
  %v1104 = vadd.f32 %v935, %v1103
  %1105 = vmatmul.bf16.gmra.mxu0 %v540
  %v1106 = vpop.f32.mrf.mxu0
  %v1107 = vadd.f32 %v938, %v1106
  %v1108 = vpop.f32.mrf.mxu0
  %v1109 = vadd.f32 %v940, %v1108
  %1110 = vmatmul.bf16.gmra.mxu0 %v543
  %v1111 = vpop.f32.mrf.mxu0
  %v1112 = vadd.f32 %v943, %v1111
  %v1113 = vpop.f32.mrf.mxu0
  %v1114 = vadd.f32 %v945, %v1113
  %1115 = vmatmul.bf16.gmra.mxu0 %v546
  %v1116 = vpop.f32.mrf.mxu0
  %v1117 = vadd.f32 %v948, %v1116
  %v1118 = vpop.f32.mrf.mxu0
  %v1119 = vadd.f32 %v950, %v1118
  %1120 = vmatmul.bf16.gmra.mxu0 %v549
  %v1121 = vpop.f32.mrf.mxu0
  %v1122 = vadd.f32 %v953, %v1121
  %v1123 = vpop.f32.mrf.mxu0
  %v1124 = vadd.f32 %v955, %v1123
  %1125 = vmatmul.bf16.gmra.mxu0 %v552
  %v1126 = vpop.f32.mrf.mxu0
  %v1127 = vadd.f32 %v958, %v1126
  %v1128 = vpop.f32.mrf.mxu0
  %v1129 = vadd.f32 %v960, %v1128
  %1130 = vmatmul.bf16.gmra.mxu0 %v555
  %v1131 = vpop.f32.mrf.mxu0
  %v1132 = vadd.f32 %v963, %v1131
  %v1133 = vpop.f32.mrf.mxu0
  %v1134 = vadd.f32 %v965, %v1133
  %1135 = vmatmul.bf16.gmra.mxu0 %v558
  %v1136 = vpop.f32.mrf.mxu0
  %v1137 = vadd.f32 %v968, %v1136
  %v1138 = vpop.f32.mrf.mxu0
  %v1139 = vadd.f32 %v970, %v1138
  %1140 = vmatmul.bf16.gmra.mxu0 %v561
  %v1141 = vpop.f32.mrf.mxu0
  %v1142 = vadd.f32 %v973, %v1141
  %v1143 = vpop.f32.mrf.mxu0
  %v1144 = vadd.f32 %v975, %v1143
  %1145 = vmatmul.bf16.gmra.mxu0 %v564
  %v1146 = vpop.f32.mrf.mxu0
  %v1147 = vadd.f32 %v978, %v1146
  %v1148 = vpop.f32.mrf.mxu0
  %v1149 = vadd.f32 %v980, %v1148
  %1150 = vmatmul.bf16.gmra.mxu0 %v567
  %v1151 = vpop.f32.mrf.mxu0
  %v1152 = vadd.f32 %v983, %v1151
  %v1153 = vpop.f32.mrf.mxu0
  %v1154 = vadd.f32 %v985, %v1153
  %1155 = vmatmul.bf16.gmra.mxu0 %v570
  %v1156 = vpop.f32.mrf.mxu0
  %v1157 = vadd.f32 %v988, %v1156
  %v1158 = vpop.f32.mrf.mxu0
  %v1159 = vadd.f32 %v990, %v1158
  %1160 = vmatmul.bf16.gmra.mxu0 %v573
  %v1161 = vpop.f32.mrf.mxu0
  %v1162 = vadd.f32 %v993, %v1161
  %v1163 = vpop.f32.mrf.mxu0
  %v1164 = vadd.f32 %v995, %v1163
  %1165 = vmatmul.bf16.gmra.mxu0 %v576
  %v1166 = vpop.f32.mrf.mxu0
  %v1167 = vadd.f32 %v998, %v1166
  %v1168 = vpop.f32.mrf.mxu0
  %v1169 = vadd.f32 %v1000, %v1168
  %1170 = vmatmul.bf16.gmra.mxu0 %v579
  %v1171 = vpop.f32.mrf.mxu0
  %v1172 = vadd.f32 %v1003, %v1171
  %v1173 = vpop.f32.mrf.mxu0
  %v1174 = vadd.f32 %v1005, %v1173
  %1175 = vmatmul.bf16.gmra.mxu0 %v582
  %v1176 = vpop.f32.mrf.mxu0
  %v1177 = vadd.f32 %v1008, %v1176
  %v1178 = vpop.f32.mrf.mxu0
  %v1179 = vadd.f32 %v1010, %v1178
  %1180 = vmatmul.bf16.gmra.mxu0 %v585
  %v1181 = vpop.f32.mrf.mxu0
  %v1182 = vadd.f32 %v1013, %v1181
  %v1183 = vpop.f32.mrf.mxu0
  %v1184 = vadd.f32 %v1015, %v1183
  %1185 = vmatmul.bf16.gmra.mxu0 %v588
  %v1186 = vpop.f32.mrf.mxu0
  %v1187 = vadd.f32 %v1018, %v1186
  %v1188 = vpop.f32.mrf.mxu0
  %v1189 = vadd.f32 %v1020, %v1188
  %1190 = vmatmul.bf16.gmra.mxu0 %v591
  %v1191 = vpop.f32.mrf.mxu0
  %v1192 = vadd.f32 %v1023, %v1191
  %v1193 = vpop.f32.mrf.mxu0
  %v1194 = vadd.f32 %v1025, %v1193
  %1195 = vmatmul.bf16.gmra.mxu0 %v594
  %v1196 = vpop.f32.mrf.mxu0
  %v1197 = vadd.f32 %v1028, %v1196
  %v1198 = vpop.f32.mrf.mxu0
  %v1199 = vadd.f32 %v1030, %v1198
  %1200 = vmatmul.bf16.gmra.mxu0 %v597
  %v1201 = vpop.f32.mrf.mxu0
  %v1202 = vadd.f32 %v1033, %v1201
  %v1203 = vpop.f32.mrf.mxu0
  %v1204 = vadd.f32 %v1035, %v1203
  %1205 = vdwg.mxu0
  %1206 = vmatpush.bf16.msra.mxu0 0
  %1207 = vmatpush.bf16.msra.mxu0 0
  %1208 = vmatpush.bf16.msra.mxu0 0
  %1209 = vmatpush.bf16.msra.mxu0 0
  %1210 = vmatpush.bf16.msra.mxu0 0
  %1211 = vmatpush.bf16.msra.mxu0 0
  %1212 = vmatpush.bf16.msra.mxu0 %v752
  %1213 = vmatpush.bf16.msra.mxu0 %v751
  %1214 = vmatmul.bf16.gmra.mxu0 %v773
  %v1215 = vpop.f32.mrf.mxu0
  %v1216 = vadd.f32 %v1047, %v1215
  %v1217 = vpop.f32.mrf.mxu0
  %v1218 = vadd.f32 %v1049, %v1217
  %1219 = vmatmul.bf16.gmra.mxu0 %v776
  %v1220 = vpop.f32.mrf.mxu0
  %v1221 = vadd.f32 %v1052, %v1220
  %v1222 = vpop.f32.mrf.mxu0
  %v1223 = vadd.f32 %v1054, %v1222
  %1224 = vmatmul.bf16.gmra.mxu0 %v779
  %v1225 = vpop.f32.mrf.mxu0
  %v1226 = vadd.f32 %v1057, %v1225
  %v1227 = vpop.f32.mrf.mxu0
  %v1228 = vadd.f32 %v1059, %v1227
  %1229 = vmatmul.bf16.gmra.mxu0 %v782
  %v1230 = vpop.f32.mrf.mxu0
  %v1231 = vadd.f32 %v1062, %v1230
  %v1232 = vpop.f32.mrf.mxu0
  %v1233 = vadd.f32 %v1064, %v1232
  %1234 = vmatmul.bf16.gmra.mxu0 %v785
  %v1235 = vpop.f32.mrf.mxu0
  %v1236 = vadd.f32 %v1067, %v1235
  %v1237 = vpop.f32.mrf.mxu0
  %v1238 = vadd.f32 %v1069, %v1237
  %1239 = vmatmul.bf16.gmra.mxu0 %v788
  %v1240 = vpop.f32.mrf.mxu0
  %v1241 = vadd.f32 %v1072, %v1240
  %v1242 = vpop.f32.mrf.mxu0
  %v1243 = vadd.f32 %v1074, %v1242
  %1244 = vmatmul.bf16.gmra.mxu0 %v791
  %v1245 = vpop.f32.mrf.mxu0
  %v1246 = vadd.f32 %v1077, %v1245
  %v1247 = vpop.f32.mrf.mxu0
  %v1248 = vadd.f32 %v1079, %v1247
  %1249 = vmatmul.bf16.gmra.mxu0 %v794
  %v1250 = vpop.f32.mrf.mxu0
  %v1251 = vadd.f32 %v1082, %v1250
  %v1252 = vpop.f32.mrf.mxu0
  %v1253 = vadd.f32 %v1084, %v1252
  %1254 = vmatmul.bf16.gmra.mxu0 %v797
  %v1255 = vpop.f32.mrf.mxu0
  %v1256 = vadd.f32 %v1087, %v1255
  %v1257 = vpop.f32.mrf.mxu0
  %v1258 = vadd.f32 %v1089, %v1257
  %1259 = vmatmul.bf16.gmra.mxu0 %v800
  %v1260 = vpop.f32.mrf.mxu0
  %v1261 = vadd.f32 %v1092, %v1260
  %v1262 = vpop.f32.mrf.mxu0
  %v1263 = vadd.f32 %v1094, %v1262
  %1264 = vmatmul.bf16.gmra.mxu0 %v803
  %v1265 = vpop.f32.mrf.mxu0
  %v1266 = vadd.f32 %v1097, %v1265
  %v1267 = vpop.f32.mrf.mxu0
  %v1268 = vadd.f32 %v1099, %v1267
  %1269 = vmatmul.bf16.gmra.mxu0 %v806
  %v1270 = vpop.f32.mrf.mxu0
  %v1271 = vadd.f32 %v1102, %v1270
  %v1272 = vpop.f32.mrf.mxu0
  %v1273 = vadd.f32 %v1104, %v1272
  %1274 = vmatmul.bf16.gmra.mxu0 %v809
  %v1275 = vpop.f32.mrf.mxu0
  %v1276 = vadd.f32 %v1107, %v1275
  %v1277 = vpop.f32.mrf.mxu0
  %v1278 = vadd.f32 %v1109, %v1277
  %1279 = vmatmul.bf16.gmra.mxu0 %v812
  %v1280 = vpop.f32.mrf.mxu0
  %v1281 = vadd.f32 %v1112, %v1280
  %v1282 = vpop.f32.mrf.mxu0
  %v1283 = vadd.f32 %v1114, %v1282
  %1284 = vmatmul.bf16.gmra.mxu0 %v815
  %v1285 = vpop.f32.mrf.mxu0
  %v1286 = vadd.f32 %v1117, %v1285
  %v1287 = vpop.f32.mrf.mxu0
  %v1288 = vadd.f32 %v1119, %v1287
  %1289 = vmatmul.bf16.gmra.mxu0 %v818
  %v1290 = vpop.f32.mrf.mxu0
  %v1291 = vadd.f32 %v1122, %v1290
  %v1292 = vpop.f32.mrf.mxu0
  %v1293 = vadd.f32 %v1124, %v1292
  %1294 = vmatmul.bf16.gmra.mxu0 %v821
  %v1295 = vpop.f32.mrf.mxu0
  %v1296 = vadd.f32 %v1127, %v1295
  %v1297 = vpop.f32.mrf.mxu0
  %v1298 = vadd.f32 %v1129, %v1297
  %1299 = vmatmul.bf16.gmra.mxu0 %v824
  %v1300 = vpop.f32.mrf.mxu0
  %v1301 = vadd.f32 %v1132, %v1300
  %v1302 = vpop.f32.mrf.mxu0
  %v1303 = vadd.f32 %v1134, %v1302
  %1304 = vmatmul.bf16.gmra.mxu0 %v827
  %v1305 = vpop.f32.mrf.mxu0
  %v1306 = vadd.f32 %v1137, %v1305
  %v1307 = vpop.f32.mrf.mxu0
  %v1308 = vadd.f32 %v1139, %v1307
  %1309 = vmatmul.bf16.gmra.mxu0 %v830
  %v1310 = vpop.f32.mrf.mxu0
  %v1311 = vadd.f32 %v1142, %v1310
  %v1312 = vpop.f32.mrf.mxu0
  %v1313 = vadd.f32 %v1144, %v1312
  %1314 = vmatmul.bf16.gmra.mxu0 %v833
  %v1315 = vpop.f32.mrf.mxu0
  %v1316 = vadd.f32 %v1147, %v1315
  %v1317 = vpop.f32.mrf.mxu0
  %v1318 = vadd.f32 %v1149, %v1317
  %1319 = vmatmul.bf16.gmra.mxu0 %v836
  %v1320 = vpop.f32.mrf.mxu0
  %v1321 = vadd.f32 %v1152, %v1320
  %v1322 = vpop.f32.mrf.mxu0
  %v1323 = vadd.f32 %v1154, %v1322
  %1324 = vmatmul.bf16.gmra.mxu0 %v839
  %v1325 = vpop.f32.mrf.mxu0
  %v1326 = vadd.f32 %v1157, %v1325
  %v1327 = vpop.f32.mrf.mxu0
  %v1328 = vadd.f32 %v1159, %v1327
  %1329 = vmatmul.bf16.gmra.mxu0 %v842
  %v1330 = vpop.f32.mrf.mxu0
  %v1331 = vadd.f32 %v1162, %v1330
  %v1332 = vpop.f32.mrf.mxu0
  %v1333 = vadd.f32 %v1164, %v1332
  %1334 = vmatmul.bf16.gmra.mxu0 %v845
  %v1335 = vpop.f32.mrf.mxu0
  %v1336 = vadd.f32 %v1167, %v1335
  %v1337 = vpop.f32.mrf.mxu0
  %v1338 = vadd.f32 %v1169, %v1337
  %1339 = vmatmul.bf16.gmra.mxu0 %v848
  %v1340 = vpop.f32.mrf.mxu0
  %v1341 = vadd.f32 %v1172, %v1340
  %v1342 = vpop.f32.mrf.mxu0
  %v1343 = vadd.f32 %v1174, %v1342
  %1344 = vmatmul.bf16.gmra.mxu0 %v851
  %v1345 = vpop.f32.mrf.mxu0
  %v1346 = vadd.f32 %v1177, %v1345
  %v1347 = vpop.f32.mrf.mxu0
  %v1348 = vadd.f32 %v1179, %v1347
  %1349 = vmatmul.bf16.gmra.mxu0 %v854
  %v1350 = vpop.f32.mrf.mxu0
  %v1351 = vadd.f32 %v1182, %v1350
  %v1352 = vpop.f32.mrf.mxu0
  %v1353 = vadd.f32 %v1184, %v1352
  %1354 = vmatmul.bf16.gmra.mxu0 %v857
  %v1355 = vpop.f32.mrf.mxu0
  %v1356 = vadd.f32 %v1187, %v1355
  %v1357 = vpop.f32.mrf.mxu0
  %v1358 = vadd.f32 %v1189, %v1357
  %1359 = vmatmul.bf16.gmra.mxu0 %v860
  %v1360 = vpop.f32.mrf.mxu0
  %v1361 = vadd.f32 %v1192, %v1360
  %v1362 = vpop.f32.mrf.mxu0
  %v1363 = vadd.f32 %v1194, %v1362
  %1364 = vmatmul.bf16.gmra.mxu0 %v863
  %v1365 = vpop.f32.mrf.mxu0
  %v1366 = vadd.f32 %v1197, %v1365
  %v1367 = vpop.f32.mrf.mxu0
  %v1368 = vadd.f32 %v1199, %v1367
  %1369 = vmatmul.bf16.gmra.mxu0 %v866
  %v1370 = vpop.f32.mrf.mxu0
  %v1371 = vadd.f32 %v1202, %v1370
  %v1372 = vpop.f32.mrf.mxu0
  %v1373 = vadd.f32 %v1204, %v1372
  %1374 = vdwg.mxu0
  %1375 = vst [vmem:[%s3] sm:$0xff] %v1216
  %1376 = vst [vmem:[%s3 + $0x8] sm:$0xff] %v1218
  %1377 = vst [vmem:[%s3 + $0x10] sm:$0xff] %v1221
  %1378 = vst [vmem:[%s3 + $0x18] sm:$0xff] %v1223
  %1379 = vst [vmem:[%s3 + $0x20] sm:$0xff] %v1226
  %1380 = vst [vmem:[%s3 + $0x28] sm:$0xff] %v1228
  %1381 = vst [vmem:[%s3 + $0x30] sm:$0xff] %v1231
  %1382 = vst [vmem:[%s3 + $0x38] sm:$0xff] %v1233
  %1383 = vst [vmem:[%s3 + $0x40] sm:$0xff] %v1236
  %1384 = vst [vmem:[%s3 + $0x48] sm:$0xff] %v1238
  %1385 = vst [vmem:[%s3 + $0x50] sm:$0xff] %v1241
  %1386 = vst [vmem:[%s3 + $0x58] sm:$0xff] %v1243
  %1387 = vst [vmem:[%s3 + $0x60] sm:$0xff] %v1246
  %1388 = vst [vmem:[%s3 + $0x68] sm:$0xff] %v1248
  %1389 = vst [vmem:[%s3 + $0x70] sm:$0xff] %v1251
  %1390 = vst [vmem:[%s3 + $0x78] sm:$0xff] %v1253
  %1391 = vst [vmem:[%s3 + $0x80] sm:$0xff] %v1256
  %1392 = vst [vmem:[%s3 + $0x88] sm:$0xff] %v1258
  %1393 = vst [vmem:[%s3 + $0x90] sm:$0xff] %v1261
  %1394 = vst [vmem:[%s3 + $0x98] sm:$0xff] %v1263
  %1395 = vst [vmem:[%s3 + $0xa0] sm:$0xff] %v1266
  %1396 = vst [vmem:[%s3 + $0xa8] sm:$0xff] %v1268
  %1397 = vst [vmem:[%s3 + $0xb0] sm:$0xff] %v1271
  %1398 = vst [vmem:[%s3 + $0xb8] sm:$0xff] %v1273
  %1399 = vst [vmem:[%s3 + $0xc0] sm:$0xff] %v1276
  %1400 = vst [vmem:[%s3 + $0xc8] sm:$0xff] %v1278
  %1401 = vst [vmem:[%s3 + $0xd0] sm:$0xff] %v1281
  %1402 = vst [vmem:[%s3 + $0xd8] sm:$0xff] %v1283
  %1403 = vst [vmem:[%s3 + $0xe0] sm:$0xff] %v1286
  %1404 = vst [vmem:[%s3 + $0xe8] sm:$0xff] %v1288
  %1405 = vst [vmem:[%s3 + $0xf0] sm:$0xff] %v1291
  %1406 = vst [vmem:[%s3 + $0xf8] sm:$0xff] %v1293
  %1407 = vst [vmem:[%s3 + $0x100] sm:$0xff] %v1296
  %1408 = vst [vmem:[%s3 + $0x108] sm:$0xff] %v1298
  %1409 = vst [vmem:[%s3 + $0x110] sm:$0xff] %v1301
  %1410 = vst [vmem:[%s3 + $0x118] sm:$0xff] %v1303
  %1411 = vst [vmem:[%s3 + $0x120] sm:$0xff] %v1306
  %1412 = vst [vmem:[%s3 + $0x128] sm:$0xff] %v1308
  %1413 = vst [vmem:[%s3 + $0x130] sm:$0xff] %v1311
  %1414 = vst [vmem:[%s3 + $0x138] sm:$0xff] %v1313
  %1415 = vst [vmem:[%s3 + $0x140] sm:$0xff] %v1316
  %1416 = vst [vmem:[%s3 + $0x148] sm:$0xff] %v1318
  %1417 = vst [vmem:[%s3 + $0x150] sm:$0xff] %v1321
  %1418 = vst [vmem:[%s3 + $0x158] sm:$0xff] %v1323
  %1419 = vst [vmem:[%s3 + $0x160] sm:$0xff] %v1326
  %1420 = vst [vmem:[%s3 + $0x168] sm:$0xff] %v1328
  %1421 = vst [vmem:[%s3 + $0x170] sm:$0xff] %v1331
  %1422 = vst [vmem:[%s3 + $0x178] sm:$0xff] %v1333
  %1423 = vst [vmem:[%s3 + $0x180] sm:$0xff] %v1336
  %1424 = vst [vmem:[%s3 + $0x188] sm:$0xff] %v1338
  %1425 = vst [vmem:[%s3 + $0x190] sm:$0xff] %v1341
  %1426 = vst [vmem:[%s3 + $0x198] sm:$0xff] %v1343
  %1427 = vst [vmem:[%s3 + $0x1a0] sm:$0xff] %v1346
  %1428 = vst [vmem:[%s3 + $0x1a8] sm:$0xff] %v1348
  %1429 = vst [vmem:[%s3 + $0x1b0] sm:$0xff] %v1351
  %1430 = vst [vmem:[%s3 + $0x1b8] sm:$0xff] %v1353
  %1431 = vst [vmem:[%s3 + $0x1c0] sm:$0xff] %v1356
  %1432 = vst [vmem:[%s3 + $0x1c8] sm:$0xff] %v1358
  %1433 = vst [vmem:[%s3 + $0x1d0] sm:$0xff] %v1361
  %1434 = vst [vmem:[%s3 + $0x1d8] sm:$0xff] %v1363
  %1435 = vst [vmem:[%s3 + $0x1e0] sm:$0xff] %v1366
  %1436 = vst [vmem:[%s3 + $0x1e8] sm:$0xff] %v1368
  %1437 = vst [vmem:[%s3 + $0x1f0] sm:$0xff] %v1371
  %1438 = vst [vmem:[%s3 + $0x1f8] sm:$0xff] %v1373
  // Predicated region
  $region14: #{gfocal_heads_forward.1} parent=0 // pred_check
    _
  $region15: #{gfocal_heads_forward.1} parent=0 // pred_check_branch
    %1440 = sbr.rel (0) target = $region17
  $region16: #{gfocal_heads_forward.1} parent=0 // pred_region
    _
  $region17: #{gfocal_heads_forward.1} parent=0 // pred_fallthru
    _
  // Predicated region
  $region18: #{gfocal_heads_forward.1} parent=0 // pred_check
    _
  $region19: #{gfocal_heads_forward.1} parent=0 // pred_check_branch
    %1442 = sbr.rel (0) target = $region21
  $region20: #{gfocal_heads_forward.1} parent=0 // pred_region
    _
  $region21: #{gfocal_heads_forward.1} parent=0 // pred_fallthru
    _

</llo_original>
